<compile_context>
chip_gen: v5e
topology: v5e:2x2
jax: 0.10.0
libtpu: 0.0.40
codegen_flags: <defaults>
</compile_context>

<pallas_src>
import functools

import jax
import jax.numpy as jnp
from jax.experimental import pallas as pl
from jax.experimental.pallas import tpu as pltpu

EPS = 1e-5
LANE = 128
SUBLANE = 8


def _layernorm_kernel(x_ref, w_ref, b_ref, o_ref, *, d_valid):
    # x_ref: (TILE_ROWS, Dp) in native dtype; padded lanes (if any) are zero,
    # so they do not perturb the sums; divisor uses the true feature size.
    x = x_ref[...].astype(jnp.float32)
    inv_d = jnp.float32(1.0 / d_valid)

    # Two independent cross-lane reductions (XLU) — no serial mean -> var chain.
    s1 = jnp.sum(x, axis=-1, keepdims=True)
    s2 = jnp.sum(x * x, axis=-1, keepdims=True)
    mean = s1 * inv_d
    var = jnp.maximum(s2 * inv_d - mean * mean, 0.0)   # biased variance (F.layer_norm)
    inv = jax.lax.rsqrt(var + EPS)                     # EUP

    # Fused affine: y = (x - mean) * (inv * w) + b
    a = inv * w_ref[...].astype(jnp.float32)
    y = (x - mean) * a + b_ref[...].astype(jnp.float32)
    o_ref[...] = y.astype(o_ref.dtype)


def layer_norm(x, weight, bias=None, *, vmem_budget_bytes=24 * 1024 * 1024):
    """x: (B, S, D); weight/bias: (D,). Returns (B, S, D) in x.dtype."""
    B, S, D = x.shape
    rows = B * S
    out_dtype = x.dtype

    if bias is None:  # module with bias=False
        bias = jnp.zeros((D,), dtype=weight.dtype)

    # Lane-dense feature dim: pad D up to a multiple of 128 (zeros are inert
    # for the sums; padded output columns are sliced off). No-op when D%128==0.
    Dp = ((D + LANE - 1) // LANE) * LANE
    x2 = x.reshape(rows, D)
    w2 = weight.reshape(1, D)
    b2 = bias.reshape(1, D)
    if Dp != D:
        x2 = jnp.pad(x2, ((0, 0), (0, Dp - D)))
        w2 = jnp.pad(w2, ((0, 0), (0, Dp - D)))
        b2 = jnp.pad(b2, ((0, 0), (0, Dp - D)))

    # Largest row tile whose double-buffered input + output fits the VMEM
    # budget (safe on v7x's 64 MiB physical VMEM, well under the raised limit).
    bytes_per_row = Dp * (x2.dtype.itemsize + jnp.dtype(out_dtype).itemsize) * 2
    tile_rows = vmem_budget_bytes // bytes_per_row
    tile_rows = max(SUBLANE, min(1024, (tile_rows // SUBLANE) * SUBLANE))
    tile_rows = min(tile_rows, ((rows + SUBLANE - 1) // SUBLANE) * SUBLANE)

    # Ragged row count: pad to a multiple of tile_rows, slice afterwards.
    rows_p = ((rows + tile_rows - 1) // tile_rows) * tile_rows
    if rows_p != rows:
        x2 = jnp.pad(x2, ((0, rows_p - rows), (0, 0)))

    kernel = functools.partial(_layernorm_kernel, d_valid=D)

    out = pl.pallas_call(
        kernel,
        out_shape=jax.ShapeDtypeStruct((rows_p, Dp), out_dtype),
        grid_spec=pltpu.PrefetchScalarGridSpec(
            num_scalar_prefetch=0,
            grid=(rows_p // tile_rows,),
            in_specs=[
                pl.BlockSpec((tile_rows, Dp), lambda i: (i, 0)),
                # weight / bias: fully VMEM-resident, never re-DMAed per step.
                pl.BlockSpec(memory_space=pltpu.MemorySpace.VMEM),
                pl.BlockSpec(memory_space=pltpu.MemorySpace.VMEM),
            ],
            out_specs=pl.BlockSpec((tile_rows, Dp), lambda i: (i, 0)),
        ),
        compiler_params=pltpu.CompilerParams(
            dimension_semantics=("parallel",),      # megacore sharding on v7x
            vmem_limit_bytes=40 * 1024 * 1024,
        ),
    )(x2, w2, b2)

    out = out[:rows, :D]
    return out.reshape(B, S, D)


if __name__ == "__main__":
    batch, seq_len, n_embd = 2, 8, 32

    # Deterministic parameter init matching the module __init__ (bias=True):
    weight = jnp.ones((n_embd,), dtype=jnp.float32)
    bias = jnp.zeros((n_embd,), dtype=jnp.float32)

    key = jax.random.PRNGKey(0)
    x = jax.random.normal(key, (batch, seq_len, n_embd), dtype=jnp.float32)

    y = layer_norm(x, weight, bias)
    jax.block_until_ready(y)

    # Reference check in plain JAX (matches F.layer_norm: biased var, eps=1e-5)
    mean = jnp.mean(x, axis=-1, keepdims=True)
    var = jnp.mean((x - mean) ** 2, axis=-1, keepdims=True)
    ref = (x - mean) * jax.lax.rsqrt(var + EPS) * weight + bias

    assert y.dtype == x.dtype, "output dtype must match input dtype"
    assert y.shape == x.shape, "output shape must match input shape"
    assert jnp.allclose(y, ref, atol=1e-5, rtol=1e-5), "mismatch vs reference"

    print("KERNEL_OK")
</pallas_src>

<mosaic_0001>
module attributes {stable_mosaic.version = 11 : i64} {
  func.func @_layernorm_kernel(%arg0: i32, %arg1: memref<16x128xf32, #tpu.memory_space<vmem>>, %arg2: memref<1x128xf32, #tpu.memory_space<vmem>>, %arg3: memref<1x128xf32, #tpu.memory_space<vmem>>, %arg4: memref<16x128xf32, #tpu.memory_space<vmem>>) attributes {dimension_semantics = [#tpu.dimension_semantics<parallel>], iteration_bounds = array<i64: 1>, scalar_prefetch = 0 : i64, scratch_operands = 0 : i64, tpu.core_type = #tpu.core_type<tc>, window_params = [{transform_indices = @transform_0, window_bounds = array<i64: 16, 128>}, {pipeline_mode = #tpu.pipeline_mode<synchronous>, transform_indices = @transform_1, window_bounds = array<i64: 1, 128>}, {pipeline_mode = #tpu.pipeline_mode<synchronous>, transform_indices = @transform_2, window_bounds = array<i64: 1, 128>}, {transform_indices = @transform_3, window_bounds = array<i64: 16, 128>}]} {
    %c0 = arith.constant 0 : index
    %c0_0 = arith.constant 0 : index
    %0 = vector.load %arg1[%c0, %c0_0] : memref<16x128xf32, #tpu.memory_space<vmem>>, vector<16x128xf32>
    %cst = arith.constant dense<0.000000e+00> : vector<16xf32>
    %1 = vector.multi_reduction <add>, %0, %cst [1] : vector<16x128xf32> to vector<16xf32>
    %2 = vector.shape_cast %1 : vector<16xf32> to vector<16x1xf32>
    %3 = arith.mulf %0, %0 : vector<16x128xf32>
    %cst_1 = arith.constant dense<0.000000e+00> : vector<16xf32>
    %4 = vector.multi_reduction <add>, %3, %cst_1 [1] : vector<16x128xf32> to vector<16xf32>
    %5 = vector.shape_cast %4 : vector<16xf32> to vector<16x1xf32>
    %cst_2 = arith.constant 3.125000e-02 : f32
    %6 = vector.broadcast %cst_2 : f32 to vector<16x1xf32>
    %7 = arith.mulf %2, %6 : vector<16x1xf32>
    %cst_3 = arith.constant 3.125000e-02 : f32
    %8 = vector.broadcast %cst_3 : f32 to vector<16x1xf32>
    %9 = arith.mulf %5, %8 : vector<16x1xf32>
    %10 = arith.mulf %7, %7 : vector<16x1xf32>
    %11 = arith.subf %9, %10 : vector<16x1xf32>
    %cst_4 = arith.constant 0.000000e+00 : f32
    %12 = vector.broadcast %cst_4 : f32 to vector<16x1xf32>
    %13 = arith.maximumf %11, %12 : vector<16x1xf32>
    %cst_5 = arith.constant 9.99999974E-6 : f32
    %14 = vector.broadcast %cst_5 : f32 to vector<16x1xf32>
    %15 = arith.addf %13, %14 : vector<16x1xf32>
    %16 = math.rsqrt %15 : vector<16x1xf32>
    %c0_6 = arith.constant 0 : index
    %c0_7 = arith.constant 0 : index
    %17 = vector.load %arg2[%c0_6, %c0_7] : memref<1x128xf32, #tpu.memory_space<vmem>>, vector<1x128xf32>
    %18 = vector.broadcast %16 : vector<16x1xf32> to vector<16x128xf32>
    %19 = vector.broadcast %17 : vector<1x128xf32> to vector<16x128xf32>
    %20 = arith.mulf %18, %19 : vector<16x128xf32>
    %21 = vector.broadcast %7 : vector<16x1xf32> to vector<16x128xf32>
    %22 = arith.subf %0, %21 : vector<16x128xf32>
    %23 = arith.mulf %22, %20 : vector<16x128xf32>
    %c0_8 = arith.constant 0 : index
    %c0_9 = arith.constant 0 : index
    %24 = vector.load %arg3[%c0_8, %c0_9] : memref<1x128xf32, #tpu.memory_space<vmem>>, vector<1x128xf32>
    %25 = vector.broadcast %24 : vector<1x128xf32> to vector<16x128xf32>
    %26 = arith.addf %23, %25 : vector<16x128xf32>
    %c0_10 = arith.constant 0 : index
    %c0_11 = arith.constant 0 : index
    %27 = vector.load %arg4[%c0_10, %c0_11] : memref<16x128xf32, #tpu.memory_space<vmem>>, vector<16x128xf32>
    tpu.vector_store %arg4[%c0_10, %c0_11], %26 {strides = array<i32>} : memref<16x128xf32, #tpu.memory_space<vmem>>, vector<16x128xf32>,
    return
  }
  func.func @transform_0(%arg0: i32) -> (i32, i32) {
    %c0_i32 = arith.constant 0 : i32
    %c0_i32_0 = arith.constant 0 : i32
    return %arg0, %c0_i32 : i32, i32
  }
  func.func @transform_1(%arg0: i32) -> (i32, i32) {
    %c0_i32 = arith.constant 0 : i32
    %c0_i32_0 = arith.constant 0 : i32
    %c0_i32_1 = arith.constant 0 : i32
    return %c0_i32, %c0_i32_0 : i32, i32
  }
  func.func @transform_2(%arg0: i32) -> (i32, i32) {
    %c0_i32 = arith.constant 0 : i32
    %c0_i32_0 = arith.constant 0 : i32
    %c0_i32_1 = arith.constant 0 : i32
    return %c0_i32, %c0_i32_0 : i32, i32
  }
  func.func @transform_3(%arg0: i32) -> (i32, i32) {
    %c0_i32 = arith.constant 0 : i32
    %c0_i32_0 = arith.constant 0 : i32
    return %arg0, %c0_i32 : i32, i32
  }
}

</mosaic_0001>

<llo_original>
// kernel: tpu_custom_call.1
$region0: #{tpu_custom_call.1}
  #allocation0 [shape = 'u32[]', space=smem, size = 0x4, offset = 0x4, fixed_abs, tag = 'smem constant byte address 0x4 - core index']
  #allocation1 [shape = 'u32[72,128]{1,0:T(1,128)}', space=vmem, size = 0x9000, scoped, tag = 'internal scratch']
  %s0 = inlined_call_operand.hbm [shape: f32[16,128], index: 0, kind: input, shape index: {}]
  %s1 = inlined_call_operand.hbm [shape: f32[1,128], index: 1, kind: input, shape index: {}]
  %s2 = inlined_call_operand.vmem [shape: f32[1,128], index: 2, kind: input, shape index: {}]
  %s3 = inlined_call_operand.hbm [shape: f32[16,128], index: 3, kind: output, shape index: {}]
  %s4 = sld [smem:[#allocation0]]
  $region30: #{tpu_custom_call.1} parent=0
    _
  %s6 = ssub.s32 1, %s4
  %s7 = scalar_select 0, %s6, %s4
  $region1: #{tpu_custom_call.1} parent=0
    #allocation2 [shape = 'u8[8192]{0}', space=vmem, size = 0x2000, scoped, tag = 'input window, operand 0, single buffered']
    #allocation3 [shape = 's32[1]{0}', space=sflag, size = 0x4, scoped, tag = 'scoped memory for tpu_custom_call.1']
    #allocation4 [shape = 's32[1]{0}', space=sflag, size = 0x4, scoped, tag = 'scoped memory for tpu_custom_call.1']
    #allocation5 [shape = 'u8[512]{0}', space=vmem, size = 0x400, scoped, tag = 'input window, operand 1, single buffered']
    #allocation6 [shape = 's32[1]{0}', space=sflag, size = 0x4, scoped, tag = 'scoped memory for tpu_custom_call.1']
    #allocation7 [shape = 'u8[8192]{0}', space=vmem, size = 0x2000, scoped, tag = 'output window, operand 0, single buffered']
    %8 = vsyncpa [#allocation3], 0
    %9 = vsyncpa [#allocation6], 0
    %10 = vsyncpa [#allocation4], 0
    // Predicated region
    $region2: #{tpu_custom_call.1} parent=1 // pred_check
      _
    $region3: #{tpu_custom_call.1} parent=1 // pred_check_branch
      %12 = sbr.rel (0) target = $region5
    $region4: #{tpu_custom_call.1} parent=1 // pred_region
      %14 = vsyncadd [#allocation3], 0
      %s15 = sshll.u32 %s0, 4
      %s16 = int_to_ptr.hbm [resolvable:$true] %s15
      %s17 = sshll.u32 [#allocation2], 4
      %s18 = int_to_ptr.vmem [resolvable:$true] %s17
      %23 = dma.hbm_to_vmem [thread:$0]  %s16, 256, %s18, [#allocation3], 128, 128, 8
    $region5: #{tpu_custom_call.1} parent=1 // pred_fallthru
      _
    // Predicated region
    $region6: #{tpu_custom_call.1} parent=1 // pred_check
      _
    $region7: #{tpu_custom_call.1} parent=1 // pred_check_branch
      %25 = sbr.rel (0) target = $region9
    $region8: #{tpu_custom_call.1} parent=1 // pred_region
      %27 = vsyncadd [#allocation6], 0
      %s29 = sshll.u32 %s1, 4
      %s30 = int_to_ptr.hbm [resolvable:$true] %s29
      %s31 = sshll.u32 [#allocation5], 4
      %s32 = int_to_ptr.vmem [resolvable:$true] %s31
      %34 = dma.hbm_to_vmem [thread:$0]  %s30, 16, %s32, [#allocation6]
    $region9: #{tpu_custom_call.1} parent=1 // pred_fallthru
      _
    // Predicated region
    $region10: #{tpu_custom_call.1} parent=1 // pred_check
      _
    $region11: #{tpu_custom_call.1} parent=1 // pred_check_branch
      %36 = sbr.rel (0) target = $region13
    $region12: #{tpu_custom_call.1} parent=1 // pred_region
      _
    $region13: #{tpu_custom_call.1} parent=1 // pred_fallthru
      _
    // Predicated region
    $region14: #{tpu_custom_call.1} parent=1 // pred_check
      _
    $region15: #{tpu_custom_call.1} parent=1 // pred_check_branch
      %38 = sbr.rel (0) target = $region17
    $region16: #{tpu_custom_call.1} parent=1 // pred_region
      %40 = dma.done [#allocation3], 256
    $region17: #{tpu_custom_call.1} parent=1 // pred_fallthru
      _
    // Predicated region
    $region18: #{tpu_custom_call.1} parent=1 // pred_check
      _
    $region19: #{tpu_custom_call.1} parent=1 // pred_check_branch
      %42 = sbr.rel (0) target = $region21
    $region20: #{tpu_custom_call.1} parent=1 // pred_region
      %44 = dma.done [#allocation6], 16
    $region21: #{tpu_custom_call.1} parent=1 // pred_fallthru
      _
    %v45 = vld [vmem:[#allocation2] sm:$0xff]
    %v46 = vld [vmem:[#allocation2 + $0x8] sm:$0xff]
    %47 = vadd.xlane.f32.xlu0 %v45
    %v48 = vpop.xlane.xlu0 %47
    %49 = vadd.xlane.f32.xlu0 %v46
    %v50 = vpop.xlane.xlu0 %49
    %v51 = vmul.f32 %v45, %v45
    %v52 = vmul.f32 %v46, %v46
    %53 = vadd.xlane.f32.xlu0 %v51
    %v54 = vpop.xlane.xlu0 %53
    %55 = vadd.xlane.f32.xlu0 %v52
    %v56 = vpop.xlane.xlu0 %55
    %v57 = vmul.f32 %v48, 0.03125
    %v58 = vmul.f32 %v50, 0.03125
    %v59 = vmul.f32 %v54, 0.03125
    %v60 = vmul.f32 %v56, 0.03125
    %v61 = vmul.f32 %v57, %v57
    %v62 = vmul.f32 %v58, %v58
    %v63 = vsub.f32 %v59, %v61
    %v64 = vsub.f32 %v60, %v62
    %v65 = vmax.f32 %v63, 0.0
    %v66 = vmax.f32 %v64, 0.0
    %v67 = vadd.f32 %v65, 1e-05
    %v68 = vadd.f32 %v66, 1e-05
    %v69 = vrsqrt.pop %v67
    %v70 = vmul.f32 %v69, %v67
    %v71 = vmul.f32 %v70, %v69
    %v72 = vmul.f32 0.5, %v71
    %v73 = vsub.f32 1.5, %v72
    %v74 = vmul.f32 %v69, %v73
    %vm75 = vweird.f32 %v67
    %vm76 = vweird.f32 %v69
    %vm77 = vmor %vm75, %vm76
    %v78 = vsel %vm77, %v69, %v74
    %v79 = vrsqrt.pop %v68
    %v80 = vmul.f32 %v79, %v68
    %v81 = vmul.f32 %v80, %v79
    %v82 = vmul.f32 0.5, %v81
    %v83 = vsub.f32 1.5, %v82
    %v84 = vmul.f32 %v79, %v83
    %vm85 = vweird.f32 %v68
    %vm86 = vweird.f32 %v79
    %vm87 = vmor %vm85, %vm86
    %v88 = vsel %vm87, %v79, %v84
    %v89 = vld [vmem:[#allocation5] sm:$0x1]
    %v91 = vperm.slane %v89, 0
    %v93 = vmul.f32 %v78, %v91
    %v94 = vmul.f32 %v88, %v91
    %v95 = vsub.f32 %v45, %v57
    %v96 = vsub.f32 %v46, %v58
    %v97 = vmul.f32 %v95, %v93
    %v98 = vmul.f32 %v96, %v94
    %v99 = vld [vmem:[%s2] sm:$0x1]
    %v101 = vperm.slane %v99, 0
    %v103 = vadd.f32 %v97, %v101
    %v104 = vadd.f32 %v98, %v101
    %105 = vst [vmem:[#allocation7] sm:$0xff] %v103
    %106 = vst [vmem:[#allocation7 + $0x8] sm:$0xff] %v104
    // Predicated region
    $region22: #{tpu_custom_call.1} parent=1 // pred_check
      _
    $region23: #{tpu_custom_call.1} parent=1 // pred_check_branch
      %108 = sbr.rel (0) target = $region25
    $region24: #{tpu_custom_call.1} parent=1 // pred_region
      %110 = vsyncadd [#allocation4], 0
      %s111 = sshll.u32 [#allocation7], 4
      %s112 = int_to_ptr.vmem [resolvable:$true] %s111
      %s113 = sshll.u32 %s3, 4
      %s114 = int_to_ptr.hbm [resolvable:$true] %s113
      %119 = dma.vmem_to_hbm [thread:$0]  %s112, 256, %s114, [#allocation4], 128, 128, 8
    $region25: #{tpu_custom_call.1} parent=1 // pred_fallthru
      _
    // Predicated region
    $region26: #{tpu_custom_call.1} parent=1 // pred_check
      _
    $region27: #{tpu_custom_call.1} parent=1 // pred_check_branch
      %121 = sbr.rel (0) target = $region29
    $region28: #{tpu_custom_call.1} parent=1 // pred_region
      %123 = dma.done [#allocation4], 256
    $region29: #{tpu_custom_call.1} parent=1 // pred_fallthru
      _
    %124 = vsyncpa [#allocation3], 1
    %125 = vsyncpa [#allocation6], 1
    %126 = vsyncpa [#allocation4], 1

</llo_original>
